<compile_context>
chip_gen: v7x
topology: tpu7x:2x2x1
jax: 0.10.0
libtpu: 0.0.40
codegen_flags: <defaults>
</compile_context>

<pallas_src>
import numpy as np
import jax
import jax.numpy as jnp
from jax import lax
from jax.experimental import pallas as pl
from jax.experimental.pallas import tpu as pltpu


def _round_up(n, m):
    return ((n + m - 1) // m) * m


def _make_kernel(c_blk, T, HW, HOWO, K):
    """Kernel over one (batch, channel-block) tile.

    x_ref   : (c_blk*T, H*W)        input spikes, rows ordered (c, t)
    sel_ref : (H*W, K*HO*WO) bf16   one-hot gather matrix, col = k*HO*WO + i*WO + j
    o_ref   : (T, c_blk*HO*WO)      flattened output slab, lane = c*HO*WO + i*WO + j
    """

    def kernel(x_ref, sel_ref, o_ref):
        f32 = jnp.float32

        # --- single MXU gather: every (kh, kw) window offset in one dot ----------
        # bf16 operands are exact for 0/1 spikes; f32 accumulation on the MXU, so
        # the gathered windows are bit-exact copies of (bf16-representable) x.
        x = x_ref[...].astype(jnp.bfloat16)                      # (c_blk*T, HW)
        wx = lax.dot_general(x, sel_ref[...],
                             (((1,), (0,)), ((), ())),
                             preferred_element_type=f32)         # (c_blk*T, K*HOWO)
        wx = wx.reshape(c_blk, T, K * HOWO)

        # --- x_cumsum.sum(time) == sum_t (T-t) * x[t] ----------------------------
        # One vectorized weighted reduction over T, on the gathered windows.
        w_t = (jnp.int32(T)
               - lax.broadcasted_iota(jnp.int32, (1, T, 1), 1)).astype(f32)
        ws = jnp.sum(wx * w_t, axis=1)                           # (c_blk, K*HOWO)

        # --- fused online argmax-gather over the K window offsets ----------------
        # strict '>' keeps the first maximal offset (kh-major, kw-minor), matching
        # max_pool2d(return_indices=True) / jnp.argmax tie-breaking.
        best_val = ws[:, :HOWO]                                  # (c_blk, HOWO)
        best_wx = wx[:, :, :HOWO]                                # (c_blk, T, HOWO)
        for k in range(1, K):
            ws_k = ws[:, k * HOWO:(k + 1) * HOWO]
            wx_k = wx[:, :, k * HOWO:(k + 1) * HOWO]
            better = ws_k > best_val
            best_val = jnp.where(better, ws_k, best_val)
            best_wx = jnp.where(better[:, None, :], wx_k, best_wx)

        # --- lane-dense (T, c_blk*HO*WO) output slab ------------------------------
        # Only c_blk (small, channel-tiled) pieces get lane-concatenated, then one
        # wide store.
        out = jnp.concatenate([best_wx[c] for c in range(c_blk)], axis=-1)
        o_ref[...] = out.astype(o_ref.dtype)

    return kernel


def spiking_3d_pooling_forward(x, kernel_size=(2, 2), stride=(2, 2),
                               dilation=(1, 1), flatten_output=False):
    """Forward pass of Spiking3DPoolingLayer (mode='2D'). Returns (output, loss)."""
    B, C, T, H, W = x.shape
    KH, KW = kernel_size
    SH, SW = stride
    DH, DW = dilation
    HO = (H - DH * (KH - 1) - 1) // SH + 1
    WO = (W - DW * (KW - 1) - 1) // SW + 1
    K = KH * KW
    HW = H * W
    HOWO = HO * WO

    # --- one-hot gather selector: built once at trace time (numpy) ---------------
    # column (kh*KW + kw)*HO*WO + i*WO + j picks pixel (i*SH + kh*DH, j*SW + kw*DW).
    kh_g, kw_g, i_g, j_g = np.meshgrid(np.arange(KH), np.arange(KW),
                                       np.arange(HO), np.arange(WO), indexing="ij")
    rows = (i_g * SH + kh_g * DH) * W + (j_g * SW + kw_g * DW)
    cols = (kh_g * KW + kw_g) * HOWO + i_g * WO + j_g
    sel_np = np.zeros((HW, K * HOWO), np.float32)
    sel_np[rows.ravel(), cols.ravel()] = 1.0
    sel = jnp.asarray(sel_np, dtype=jnp.bfloat16)
    # TODO(synk): the selector scales as (H*W)*(K*HO*WO) (~quartic in spatial size);
    # for very large feature maps switch back to per-row-offset strided gathers.

    itemsize = jnp.dtype(x.dtype).itemsize

    def vmem_estimate(cb):
        # padded (8,128)-tile footprints; pipelined buffers counted twice.
        in_tile = _round_up(cb * T, 8) * _round_up(HW, 128) * itemsize
        out_tile = _round_up(T, 8) * _round_up(cb * HOWO, 128) * itemsize
        sel_tile = _round_up(HW, 16) * _round_up(K * HOWO, 128) * 2
        work = (_round_up(cb * T, 16) * _round_up(HW, 128) * 2          # bf16 x
                + cb * _round_up(T, 8) * _round_up(K * HOWO, 128) * 4   # wx (f32)
                + 3 * cb * _round_up(T, 8) * _round_up(HOWO, 128) * 4)  # best_* / out
        return 2 * in_tile + 2 * out_tile + 2 * sel_tile + work

    def blk_ok(d):
        if d == C:
            return True  # full-extent blocks bypass the (8,128) divisibility rule
        return (d * T) % 8 == 0 and (d * HOWO) % 128 == 0

    divisors = [d for d in range(1, C + 1) if C % d == 0 and blk_ok(d)]
    budget = 24 << 20           # conservative wrt v7x (64 MiB VMEM, 32 MiB scoped)
    c_blk = None
    for d in sorted(divisors, reverse=True):
        if vmem_estimate(d) <= budget:
            c_blk = d
            break
    if c_blk is None:
        c_blk = min(divisors)
    vmem_limit = int(min(max(vmem_estimate(c_blk) * 3 // 2 + (4 << 20), 16 << 20),
                         64 << 20))

    kernel = _make_kernel(c_blk, T, HW, HOWO, K)

    # Pre-flatten x to (B, C*T, H*W): lane-dense input blocks (H*W lanes instead of
    # W < 128 padded to 128), and blocking dim 1 by c_blk*T selects a contiguous
    # channel block across all time steps with no in-kernel H/W merge.
    x_flat = x.reshape(B, C * T, HW)

    flat = pl.pallas_call(
        kernel,
        out_shape=jax.ShapeDtypeStruct((B, T, C * HOWO), x.dtype),
        grid=(B, C // c_blk),
        in_specs=[
            pl.BlockSpec((None, c_blk * T, HW), lambda b, cb: (b, cb, 0)),
            # constant index_map -> selector is DMA'd once and stays resident
            pl.BlockSpec((HW, K * HOWO), lambda b, cb: (0, 0)),
        ],
        out_specs=pl.BlockSpec((None, T, c_blk * HOWO), lambda b, cb: (b, 0, cb)),
        compiler_params=pltpu.CompilerParams(
            # both grid axes independent -> megacore sharding on v7x
            dimension_semantics=("parallel", "parallel"),
            vmem_limit_bytes=vmem_limit),
    )(x_flat, sel)

    # TODO(synk): spk_rec_hist (detached host-side numpy copy) is logging-only; skipped.
    # loss = 0 * spk_rec.mean() is identically zero (zero gradient); return a constant
    # instead of reading spk_rec back from HBM.
    loss = jnp.zeros((), x.dtype)

    if flatten_output:
        return flat, loss
    spk_rec = jnp.transpose(flat.reshape(B, T, C, HO, WO), (0, 2, 1, 3, 4))
    return spk_rec, loss


def _reference(x, kernel_size, stride, dilation):
    """Pure-JAX reference of the same semantics (same first-max tie break)."""
    B, C, T, H, W = x.shape
    KH, KW = kernel_size
    SH, SW = stride
    DH, DW = dilation
    HO = (H - DH * (KH - 1) - 1) // SH + 1
    WO = (W - DW * (KW - 1) - 1) // SW + 1

    w = (T - jnp.arange(T, dtype=x.dtype))[None, None, :, None, None]
    x_sum = jnp.sum(x * w, axis=2)                                    # (B, C, H, W)

    wins, xwins = [], []
    for kh in range(KH):
        for kw in range(KW):
            h0, w0 = kh * DH, kw * DW
            sl_h = slice(h0, h0 + (HO - 1) * SH + 1, SH)
            sl_w = slice(w0, w0 + (WO - 1) * SW + 1, SW)
            wins.append(x_sum[:, :, sl_h, sl_w])
            xwins.append(x[:, :, :, sl_h, sl_w])
    wins = jnp.stack(wins, axis=0)                                    # (K, B, C, HO, WO)
    xwins = jnp.stack(xwins, axis=0)                                  # (K, B, C, T, HO, WO)
    k_star = jnp.argmax(wins, axis=0)                                 # first max
    idx = jnp.broadcast_to(k_star[None, :, :, None, :, :], (1,) + xwins.shape[1:])
    spk = jnp.take_along_axis(xwins, idx, axis=0)[0]                  # (B, C, T, HO, WO)
    return spk


if __name__ == "__main__":
    # Small deterministic example: batch=2, channels=4 (in == out for pooling),
    # time steps=8, spatial 16x16, kernel 2x2, stride 2, dilation 1 -> output 8x8.
    key = jax.random.PRNGKey(0)
    B, C, T, H, W = 2, 4, 8, 16, 16
    x = jax.random.bernoulli(key, 0.3, (B, C, T, H, W)).astype(jnp.float32)

    kernel_size, stride, dilation = (2, 2), (2, 2), (1, 1)

    out, loss = spiking_3d_pooling_forward(x, kernel_size, stride, dilation,
                                           flatten_output=False)
    out = jax.block_until_ready(out)
    loss = jax.block_until_ready(loss)

    ref = _reference(x, kernel_size, stride, dilation)
    assert out.shape == (B, C, T, 8, 8), out.shape
    assert jnp.allclose(out, ref), "Pallas kernel mismatch vs JAX reference"
    assert float(loss) == 0.0

    # Flattened path (kernel output is already in this layout, no extra transpose).
    flat, _ = spiking_3d_pooling_forward(x, kernel_size, stride, dilation,
                                         flatten_output=True)
    flat = jax.block_until_ready(flat)
    ref_flat = jnp.transpose(ref, (0, 2, 1, 3, 4)).reshape(B, T, C * 8 * 8)
    assert flat.shape == (B, T, C * 8 * 8), flat.shape
    assert jnp.allclose(flat, ref_flat), "flattened output mismatch"

    print("KERNEL_OK")
</pallas_src>

<mosaic_0001>
module attributes {stable_mosaic.version = 11 : i64} {
  func.func @kernel(%arg0: i32, %arg1: i32, %arg2: memref<1x32x256xf32, #tpu.memory_space<vmem>>, %arg3: memref<256x256xbf16, #tpu.memory_space<vmem>>, %arg4: memref<1x8x256xf32, #tpu.memory_space<vmem>>) attributes {dimension_semantics = [#tpu.dimension_semantics<parallel>, #tpu.dimension_semantics<parallel>], iteration_bounds = array<i64: 2, 1>, scalar_prefetch = 0 : i64, scratch_operands = 0 : i64, tpu.core_type = #tpu.core_type<tc>, window_params = [{transform_indices = @transform_0, window_bounds = array<i64: 1, 32, 256>}, {pipeline_mode = #tpu.pipeline_mode<synchronous>, transform_indices = @transform_1, window_bounds = array<i64: 256, 256>}, {transform_indices = @transform_2, window_bounds = array<i64: 1, 8, 256>}]} {
    %c0 = arith.constant 0 : index
    %c0_0 = arith.constant 0 : index
    %c0_1 = arith.constant 0 : index
    %0 = vector.load %arg2[%c0, %c0_0, %c0_1] : memref<1x32x256xf32, #tpu.memory_space<vmem>>, vector<1x32x256xf32>
    %1 = vector.shape_cast %0 : vector<1x32x256xf32> to vector<32x256xf32>
    %2 = arith.truncf %1 : vector<32x256xf32> to vector<32x256xbf16>
    %c0_2 = arith.constant 0 : index
    %c0_3 = arith.constant 0 : index
    %3 = vector.load %arg3[%c0_2, %c0_3] : memref<256x256xbf16, #tpu.memory_space<vmem>>, vector<256x256xbf16>
    %cst = arith.constant dense<0.000000e+00> : vector<32x256xf32>
    %4 = tpu.matmul %2, %3, %cst {dimension_numbers = #tpu.dot_dimension_numbers<[1], [0], [0], [1], [0, 0, 1, 1], [], []>} : vector<32x256xbf16>, vector<256x256xbf16>, vector<32x256xf32> -> vector<32x256xf32>
    %5 = vector.shape_cast %4 : vector<32x256xf32> to vector<4x8x256xf32>
    %6 = tpu.iota {dimensions = array<i32: 1>} : vector<1x8x1xi32>
    %c8_i32 = arith.constant 8 : i32
    %7 = vector.broadcast %c8_i32 : i32 to vector<1x8x1xi32>
    %8 = arith.subi %7, %6 : vector<1x8x1xi32>
    %9 = arith.sitofp %8 : vector<1x8x1xi32> to vector<1x8x1xf32>
    %10 = vector.broadcast %9 : vector<1x8x1xf32> to vector<4x8x256xf32>
    %11 = arith.mulf %5, %10 : vector<4x8x256xf32>
    %cst_4 = arith.constant dense<0.000000e+00> : vector<4x256xf32>
    %12 = vector.multi_reduction <add>, %11, %cst_4 [1] : vector<4x8x256xf32> to vector<4x256xf32>
    %13 = vector.extract_strided_slice %12 {offsets = [0, 0], sizes = [4, 64], strides = [1, 1]} : vector<4x256xf32> to vector<4x64xf32>
    %14 = vector.extract_strided_slice %5 {offsets = [0, 0, 0], sizes = [4, 8, 64], strides = [1, 1, 1]} : vector<4x8x256xf32> to vector<4x8x64xf32>
    %15 = vector.extract_strided_slice %12 {offsets = [0, 64], sizes = [4, 64], strides = [1, 1]} : vector<4x256xf32> to vector<4x64xf32>
    %16 = vector.extract_strided_slice %5 {offsets = [0, 0, 64], sizes = [4, 8, 64], strides = [1, 1, 1]} : vector<4x8x256xf32> to vector<4x8x64xf32>
    %17 = arith.cmpf ogt, %15, %13 : vector<4x64xf32>
    %18 = arith.select %17, %15, %13 : vector<4x64xi1>, vector<4x64xf32>
    %19 = vector.shape_cast %17 : vector<4x64xi1> to vector<4x1x64xi1>
    %20 = vector.shape_cast %19 : vector<4x1x64xi1> to vector<4x1x64xi1>
    %21 = vector.broadcast %20 : vector<4x1x64xi1> to vector<4x8x64xi1>
    %22 = arith.select %21, %16, %14 : vector<4x8x64xi1>, vector<4x8x64xf32>
    %23 = vector.extract_strided_slice %12 {offsets = [0, 128], sizes = [4, 64], strides = [1, 1]} : vector<4x256xf32> to vector<4x64xf32>
    %24 = vector.extract_strided_slice %5 {offsets = [0, 0, 128], sizes = [4, 8, 64], strides = [1, 1, 1]} : vector<4x8x256xf32> to vector<4x8x64xf32>
    %25 = arith.cmpf ogt, %23, %18 : vector<4x64xf32>
    %26 = arith.select %25, %23, %18 : vector<4x64xi1>, vector<4x64xf32>
    %27 = vector.shape_cast %25 : vector<4x64xi1> to vector<4x1x64xi1>
    %28 = vector.shape_cast %27 : vector<4x1x64xi1> to vector<4x1x64xi1>
    %29 = vector.broadcast %28 : vector<4x1x64xi1> to vector<4x8x64xi1>
    %30 = arith.select %29, %24, %22 : vector<4x8x64xi1>, vector<4x8x64xf32>
    %31 = vector.extract_strided_slice %12 {offsets = [0, 192], sizes = [4, 64], strides = [1, 1]} : vector<4x256xf32> to vector<4x64xf32>
    %32 = vector.extract_strided_slice %5 {offsets = [0, 0, 192], sizes = [4, 8, 64], strides = [1, 1, 1]} : vector<4x8x256xf32> to vector<4x8x64xf32>
    %33 = arith.cmpf ogt, %31, %26 : vector<4x64xf32>
    %34 = vector.shape_cast %33 : vector<4x64xi1> to vector<4x1x64xi1>
    %35 = vector.shape_cast %34 : vector<4x1x64xi1> to vector<4x1x64xi1>
    %36 = vector.broadcast %35 : vector<4x1x64xi1> to vector<4x8x64xi1>
    %37 = arith.select %36, %32, %30 : vector<4x8x64xi1>, vector<4x8x64xf32>
    %38 = vector.extract_strided_slice %37 {offsets = [0, 0, 0], sizes = [1, 8, 64], strides = [1, 1, 1]} : vector<4x8x64xf32> to vector<1x8x64xf32>
    %39 = vector.shape_cast %38 : vector<1x8x64xf32> to vector<8x64xf32>
    %40 = vector.extract_strided_slice %37 {offsets = [1, 0, 0], sizes = [1, 8, 64], strides = [1, 1, 1]} : vector<4x8x64xf32> to vector<1x8x64xf32>
    %41 = vector.shape_cast %40 : vector<1x8x64xf32> to vector<8x64xf32>
    %42 = vector.extract_strided_slice %37 {offsets = [2, 0, 0], sizes = [1, 8, 64], strides = [1, 1, 1]} : vector<4x8x64xf32> to vector<1x8x64xf32>
    %43 = vector.shape_cast %42 : vector<1x8x64xf32> to vector<8x64xf32>
    %44 = vector.extract_strided_slice %37 {offsets = [3, 0, 0], sizes = [1, 8, 64], strides = [1, 1, 1]} : vector<4x8x64xf32> to vector<1x8x64xf32>
    %45 = vector.shape_cast %44 : vector<1x8x64xf32> to vector<8x64xf32>
    %46 = tpu.concatenate %39, %41, %43, %45 in 1 : vector<8x64xf32>, vector<8x64xf32>, vector<8x64xf32>, vector<8x64xf32> -> vector<8x256xf32>
    %c0_5 = arith.constant 0 : index
    %c0_6 = arith.constant 0 : index
    %c0_7 = arith.constant 0 : index
    %47 = vector.load %arg4[%c0_5, %c0_6, %c0_7] : memref<1x8x256xf32, #tpu.memory_space<vmem>>, vector<1x8x256xf32>
    %48 = vector.shape_cast %47 : vector<1x8x256xf32> to vector<8x256xf32>
    %49 = vector.shape_cast %46 : vector<8x256xf32> to vector<1x8x256xf32>
    tpu.vector_store %arg4[%c0_5, %c0_6, %c0_7], %49 {strides = array<i32>} : memref<1x8x256xf32, #tpu.memory_space<vmem>>, vector<1x8x256xf32>,
    return
  }
  func.func @transform_0(%arg0: i32, %arg1: i32) -> (i32, i32, i32) {
    %c0_i32 = arith.constant 0 : i32
    %c0_i32_0 = arith.constant 0 : i32
    return %arg0, %arg1, %c0_i32 : i32, i32, i32
  }
  func.func @transform_1(%arg0: i32, %arg1: i32) -> (i32, i32) {
    %c0_i32 = arith.constant 0 : i32
    %c0_i32_0 = arith.constant 0 : i32
    %c0_i32_1 = arith.constant 0 : i32
    return %c0_i32, %c0_i32_0 : i32, i32
  }
  func.func @transform_2(%arg0: i32, %arg1: i32) -> (i32, i32, i32) {
    %c0_i32 = arith.constant 0 : i32
    %c0_i32_0 = arith.constant 0 : i32
    return %arg0, %c0_i32, %arg1 : i32, i32, i32
  }
}

</mosaic_0001>

<llo_original>
// kernel: tpu_custom_call.1
$region0: #{tpu_custom_call.1}
  #allocation0 [shape = 'u32[]', space=smem, size = 0x4, offset = 0x4, fixed_abs, tag = 'smem constant byte address 0x4 - core index']
  #allocation1 [shape = 'u32[144,128]{1,0:T(1,128)}', space=vmem, size = 0x12000, scoped, tag = 'internal scratch']
  %s0 = inlined_call_operand.hbm [shape: f32[2,32,256], index: 0, kind: input, shape index: {}]
  %s1 = inlined_call_operand.hbm [shape: bf16[256,256], index: 1, kind: input, shape index: {}]
  %s2 = inlined_call_operand.hbm [shape: f32[2,8,256], index: 2, kind: output, shape index: {}]
  %s3 = sld [smem:[#allocation0]]
  $region49: #{tpu_custom_call.1} parent=0
    _
  %s5 = ssub.s32 1, %s3
  %s6 = scalar_select 0, %s5, %s3
  $region1: #{tpu_custom_call.1} parent=0
    #allocation2 [shape = 'u8[65536]{0}', space=vmem, size = 0x10000, scoped, tag = 'input window, operand 0']
    #allocation3 [shape = 's32[2]{0}', space=sflag, size = 0x8, scoped, tag = 'scoped memory for tpu_custom_call.1']
    #allocation4 [shape = 's32[2]{0}', space=sflag, size = 0x8, scoped, tag = 'scoped memory for tpu_custom_call.1']
    #allocation5 [shape = 'u8[131072]{0}', space=vmem, size = 0x20000, scoped, tag = 'input window, operand 1, single buffered']
    #allocation6 [shape = 's32[1]{0}', space=sflag, size = 0x4, scoped, tag = 'scoped memory for tpu_custom_call.1']
    #allocation7 [shape = 'u8[16384]{0}', space=vmem, size = 0x4000, scoped, tag = 'output window, operand 0']
    %7 = vsyncpa [#allocation3], 0
    %s8 = scalar_lea.sflag [#allocation3], 1
    %9 = vsyncpa %s8, 0
    %10 = vsyncpa [#allocation6], 0
    %11 = vsyncpa [#allocation4], 0
    %s12 = scalar_lea.sflag [#allocation4], 1
    %13 = vsyncpa %s12, 0
    loop: start=0, step=1, limit=4
    $region2: #{tpu_custom_call.1} parent=1 // loop_pre_header
      _
    $region3: #{tpu_custom_call.1} parent=1 // loop_header
      %s15 = sphi 0, %s19
      %p16 = scmp.ge.s32.totalorder %s15, 4
      %s22 = sphi 0, %s34
      %s23 = sphi 0, %s30
      %s24 = sphi 0, %s22
      %s25 = sphi 0, %s23
      %s26 = sphi 0, %s24
      %s27 = sphi 0, %s25
      %s39 = sphi 0, %s41
      %s42 = sphi 0, %s39
      %s43 = sphi 0, %s42
      %s59 = sphi 0, %s43
      %s63 = sphi 0, %s63
      %s65 = sphi 0, %s63
      %s66 = sphi 0, %s65
      %s80 = sphi 0, %s66
      %s88 = sphi 0, %s90
      %s91 = sphi 0, %s88
      %s92 = sphi 0, %s91
      %s108 = sphi 0, %s92
    $region4: #{tpu_custom_call.1} parent=1 // loop_header_branch
      %18 = sbr.rel (%p16) target = $region8
    $region5: #{tpu_custom_call.1} parent=1 // loop_body
      %s20 = ssub.s32 %s15, 1
      %s21 = ssub.s32 %s15, 2
      %s28 = sadd.s32 1, %s23
      %p29 = scmp.ge.s32.totalorder %s28, 1
      %s30 = scalar_select %p29, 0, %s28
      %s31 = sadd.s32 1, %s22
      %s32 = scalar_select %p29, %s31, %s22
      %p33 = scmp.ge.s32.totalorder %s32, 2
      %s34 = scalar_select %p33, 0, %s32
      %s35 = ssub.s32 %s22, %s34
      %s36 = ssub.s32 %s23, %s30
      %s37 = sor.u32 %s35, %s36
      %p38 = scmp.eq.s32.totalorder %s37, 0
      %s40 = sadd.s32 %s39, 1
      %s41 = scalar_select %p38, %s39, %s40
      %p44 = pneg %p38
      %p45 = scmp.eq.s32.totalorder %s15, 1
      %p46 = por %p44, %p45
      %p47 = scmp.ne.s32.totalorder %s39, %s42
      %p48 = scmp.eq.s32.totalorder %s15, 0
      %p49 = por %p47, %p48
      %p50 = scmp.ne.s32.totalorder %s39, %s42
      %p51 = scmp.eq.s32.totalorder %s20, 1
      %p52 = por %p50, %p51
      %p53 = scmp.ne.s32.totalorder %s42, %s43
      %p54 = scmp.eq.s32.totalorder %s20, 0
      %p55 = por %p53, %p54
      %p56 = scmp.ne.s32.totalorder %s42, %s43
      %p57 = scmp.eq.s32.totalorder %s21, 1
      %p58 = por %p56, %p57
      %p60 = scmp.ne.s32.totalorder %s43, %s59
      %p61 = scmp.eq.s32.totalorder %s21, 0
      %p62 = por %p60, %p61
      %s64 = sadd.s32 %s63, 1
      %p67 = scmp.eq.s32.totalorder %s15, 1
      %p68 = scmp.ne.s32.totalorder %s63, %s65
      %p69 = scmp.eq.s32.totalorder %s15, 0
      %p70 = por %p68, %p69
      %p71 = scmp.ne.s32.totalorder %s63, %s65
      %p72 = scmp.eq.s32.totalorder %s20, 1
      %p73 = por %p71, %p72
      %p74 = scmp.ne.s32.totalorder %s65, %s66
      %p75 = scmp.eq.s32.totalorder %s20, 0
      %p76 = por %p74, %p75
      %p77 = scmp.ne.s32.totalorder %s65, %s66
      %p78 = scmp.eq.s32.totalorder %s21, 1
      %p79 = por %p77, %p78
      %p81 = scmp.ne.s32.totalorder %s66, %s80
      %p82 = scmp.eq.s32.totalorder %s21, 0
      %p83 = por %p81, %p82
      %s84 = ssub.s32 %s22, %s34
      %s85 = ssub.s32 %s23, %s30
      %s86 = sor.u32 %s84, %s85
      %p87 = scmp.eq.s32.totalorder %s86, 0
      %s89 = sadd.s32 %s88, 1
      %s90 = scalar_select %p87, %s88, %s89
      %p93 = pneg %p87
      %p94 = scmp.eq.s32.totalorder %s15, 1
      %p95 = por %p93, %p94
      %p96 = scmp.ne.s32.totalorder %s88, %s91
      %p97 = scmp.eq.s32.totalorder %s15, 0
      %p98 = por %p96, %p97
      %p99 = scmp.ne.s32.totalorder %s88, %s91
      %p100 = scmp.eq.s32.totalorder %s20, 1
      %p101 = por %p99, %p100
      %p102 = scmp.ne.s32.totalorder %s91, %s92
      %p103 = scmp.eq.s32.totalorder %s20, 0
      %p104 = por %p102, %p103
      %p105 = scmp.ne.s32.totalorder %s91, %s92
      %p106 = scmp.eq.s32.totalorder %s21, 1
      %p107 = por %p105, %p106
      %p109 = scmp.ne.s32.totalorder %s92, %s108
      %p110 = scmp.eq.s32.totalorder %s21, 0
      %p111 = por %p109, %p110
      %p112 = scmp.le.s32.totalorder 1, %s15
      %p113 = scmp.lt.s32.totalorder %s15, 3
      %p114 = pnand %p112, %p113
      %p115 = pneg %p114
      // Predicated region
      $region9: #{tpu_custom_call.1} parent=5 // pred_check
        _
      $region10: #{tpu_custom_call.1} parent=5 // pred_check_branch
        %117 = sbr.rel (%p114) target = $region12
      $region11: #{tpu_custom_call.1} parent=5 // pred_region
        %s118 = ssub.s32 %s15, 1
        // Predicated region
        $region13: #{tpu_custom_call.1} parent=11 // pred_check
          %p119 = pneg %p76
        $region14: #{tpu_custom_call.1} parent=11 // pred_check_branch
          %121 = sbr.rel (%p119) target = $region16
        $region15: #{tpu_custom_call.1} parent=11 // pred_region
          %s123 = ssub.s32 4096, 4096
          %124 = vsyncadd [#allocation6], %s123
          %s125 = sshll.u32 [#allocation5], 4
          %s126 = int_to_ptr.vmem [resolvable:$true] %s125
          %131 = dma.hbm_to_vmem [thread:$0]  %s1, 4096, %s126, [#allocation6], 128, 128, 8
        $region16: #{tpu_custom_call.1} parent=11 // pred_fallthru
          _
      $region12: #{tpu_custom_call.1} parent=5 // pred_fallthru
        _
      %p132 = scmp.lt.s32.totalorder %s15, 2
      // Predicated region
      $region17: #{tpu_custom_call.1} parent=5 // pred_check
        %p133 = pneg %p132
      $region18: #{tpu_custom_call.1} parent=5 // pred_check_branch
        %135 = sbr.rel (%p133) target = $region20
      $region19: #{tpu_custom_call.1} parent=5 // pred_region
        // Predicated region
        $region21: #{tpu_custom_call.1} parent=19 // pred_check
          %p136 = pneg %p49
        $region22: #{tpu_custom_call.1} parent=19 // pred_check_branch
          %138 = sbr.rel (%p136) target = $region24
        $region23: #{tpu_custom_call.1} parent=19 // pred_region
          %s139 = sand.u32 %s39, 1
          %s140 = scalar_lea.sflag [#allocation3], %s139
          %s141 = sand.u32 %s39, 1
          %s142 = smul.addr %s141, 64
          %s143 = scalar_lea.vmem [#allocation2], %s142
          %s144 = smul.u32 4, %s23
          %s146 = ssub.s32 1024, 1024
          %147 = vsyncadd %s140, %s146
          %s148 = smul.addr %s144, 2
          %s149 = smul.addr %s22, 8
          %s150 = sadd.s32 %s148, %s149
          %s151 = smul.addr %s150, 128
          %s152 = scalar_lea.hbm %s0, %s151
          %s153 = sshll.u32 %s143, 4
          %s154 = int_to_ptr.vmem [resolvable:$true] %s153
          %159 = dma.hbm_to_vmem [thread:$0]  %s152, 1024, %s154, %s140, 256, 256, 16
        $region24: #{tpu_custom_call.1} parent=19 // pred_fallthru
          _
      $region20: #{tpu_custom_call.1} parent=5 // pred_fallthru
        _
      %p160 = scmp.le.s32.totalorder 1, %s15
      %p161 = scmp.lt.s32.totalorder %s15, 3
      %p162 = pnand %p160, %p161
      %p163 = pneg %p162
      // Predicated region
      $region25: #{tpu_custom_call.1} parent=5 // pred_check
        _
      $region26: #{tpu_custom_call.1} parent=5 // pred_check_branch
        %165 = sbr.rel (%p162) target = $region28
      $region27: #{tpu_custom_call.1} parent=5 // pred_region
        %s166 = ssub.s32 %s15, 1
        %s167 = sand.u32 %s42, 1
        %s168 = scalar_lea.sflag [#allocation3], %s167
        %s169 = sand.u32 %s42, 1
        %s170 = smul.addr %s169, 64
        %s171 = scalar_lea.vmem [#allocation2], %s170
        // Predicated region
        $region29: #{tpu_custom_call.1} parent=27 // pred_check
          %p172 = pneg %p55
        $region30: #{tpu_custom_call.1} parent=27 // pred_check_branch
          %174 = sbr.rel (%p172) target = $region32
        $region31: #{tpu_custom_call.1} parent=27 // pred_region
          %175 = dma.done %s168, 1024
        $region32: #{tpu_custom_call.1} parent=27 // pred_fallthru
          _
        // Predicated region
        $region33: #{tpu_custom_call.1} parent=27 // pred_check
          %p176 = pneg %p76
        $region34: #{tpu_custom_call.1} parent=27 // pred_check_branch
          %178 = sbr.rel (%p176) target = $region36
        $region35: #{tpu_custom_call.1} parent=27 // pred_region
          %179 = dma.done [#allocation6], 4096
        $region36: #{tpu_custom_call.1} parent=27 // pred_fallthru
          _
        %s180 = sand.u32 %s42, 1
        %s181 = scalar_lea.sflag [#allocation3], %s180
        %s182 = sand.u32 %s42, 1
        %s183 = smul.addr %s182, 64
        %s184 = scalar_lea.vmem [#allocation2], %s183
        %p185 = pneg %p55
        %p186 = pneg %p52
        %p187 = pneg %p76
        %p188 = pneg %p73
        %p189 = pneg %p104
        %p190 = pneg %p101
        %s191 = sand.u32 %s91, 1
        %s192 = scalar_lea.sflag [#allocation4], %s191
        %s193 = sand.u32 %s91, 1
        %s194 = smul.addr %s193, 16
        %s195 = scalar_lea.vmem [#allocation7], %s194
        %s196 = smul.u32 4, %s25
        %s197 = smul.u32 2, %s25
        %v198 = vld [vmem:[%s171] sm:$0xff]
        %v199 = vld [vmem:[%s171 + $0x8] sm:$0xff]
        %v200 = vld [vmem:[%s171 + $0x10] sm:$0xff]
        %v201 = vld [vmem:[%s171 + $0x18] sm:$0xff]
        %v202 = vld [vmem:[%s171 + $0x20] sm:$0xff]
        %v203 = vld [vmem:[%s171 + $0x28] sm:$0xff]
        %v204 = vld [vmem:[%s171 + $0x30] sm:$0xff]
        %v205 = vld [vmem:[%s171 + $0x38] sm:$0xff]
        %v206 = vpack.c.bf16 %v200, %v198
        %v207 = vpack.c.bf16 %v201, %v199
        %v208 = vpack.c.bf16 %v204, %v202
        %v209 = vpack.c.bf16 %v205, %v203
        %v210 = vld [vmem:[#allocation5] sm:$0xff]
        %v211 = vld [vmem:[#allocation5 + $0x8] sm:$0xff]
        %v212 = vld [vmem:[#allocation5 + $0x10] sm:$0xff]
        %v213 = vld [vmem:[#allocation5 + $0x18] sm:$0xff]
        %v214 = vld [vmem:[#allocation5 + $0x20] sm:$0xff]
        %v215 = vld [vmem:[#allocation5 + $0x28] sm:$0xff]
        %v216 = vld [vmem:[#allocation5 + $0x30] sm:$0xff]
        %v217 = vld [vmem:[#allocation5 + $0x38] sm:$0xff]
        %v218 = vld [vmem:[#allocation5 + $0x40] sm:$0xff]
        %v219 = vld [vmem:[#allocation5 + $0x48] sm:$0xff]
        %v220 = vld [vmem:[#allocation5 + $0x50] sm:$0xff]
        %v221 = vld [vmem:[#allocation5 + $0x58] sm:$0xff]
        %v222 = vld [vmem:[#allocation5 + $0x60] sm:$0xff]
        %v223 = vld [vmem:[#allocation5 + $0x68] sm:$0xff]
        %v224 = vld [vmem:[#allocation5 + $0x70] sm:$0xff]
        %v225 = vld [vmem:[#allocation5 + $0x78] sm:$0xff]
        %v226 = vld [vmem:[#allocation5 + $0x80] sm:$0xff]
        %v227 = vld [vmem:[#allocation5 + $0x88] sm:$0xff]
        %v228 = vld [vmem:[#allocation5 + $0x90] sm:$0xff]
        %v229 = vld [vmem:[#allocation5 + $0x98] sm:$0xff]
        %v230 = vld [vmem:[#allocation5 + $0xa0] sm:$0xff]
        %v231 = vld [vmem:[#allocation5 + $0xa8] sm:$0xff]
        %v232 = vld [vmem:[#allocation5 + $0xb0] sm:$0xff]
        %v233 = vld [vmem:[#allocation5 + $0xb8] sm:$0xff]
        %v234 = vld [vmem:[#allocation5 + $0xc0] sm:$0xff]
        %v235 = vld [vmem:[#allocation5 + $0xc8] sm:$0xff]
        %v236 = vld [vmem:[#allocation5 + $0xd0] sm:$0xff]
        %v237 = vld [vmem:[#allocation5 + $0xd8] sm:$0xff]
        %v238 = vld [vmem:[#allocation5 + $0xe0] sm:$0xff]
        %v239 = vld [vmem:[#allocation5 + $0xe8] sm:$0xff]
        %v240 = vld [vmem:[#allocation5 + $0xf0] sm:$0xff]
        %v241 = vld [vmem:[#allocation5 + $0xf8] sm:$0xff]
        %v274 = vunpack.c.l.b16 %v210
        %v275 = vunpack.c.h.b16 %v210
        %v276 = vunpack.c.l.b16 %v211
        %v277 = vunpack.c.h.b16 %v211
        %v278 = vunpack.c.l.b16 %v212
        %v279 = vunpack.c.h.b16 %v212
        %v280 = vunpack.c.l.b16 %v213
        %v281 = vunpack.c.h.b16 %v213
        %v282 = vunpack.c.l.b16 %v214
        %v283 = vunpack.c.h.b16 %v214
        %v284 = vunpack.c.l.b16 %v215
        %v285 = vunpack.c.h.b16 %v215
        %v286 = vunpack.c.l.b16 %v216
        %v287 = vunpack.c.h.b16 %v216
        %v288 = vunpack.c.l.b16 %v217
        %v289 = vunpack.c.h.b16 %v217
        %v290 = vunpack.c.l.b16 %v218
        %v291 = vunpack.c.h.b16 %v218
        %v292 = vunpack.c.l.b16 %v219
        %v293 = vunpack.c.h.b16 %v219
        %v294 = vunpack.c.l.b16 %v220
        %v295 = vunpack.c.h.b16 %v220
        %v296 = vunpack.c.l.b16 %v221
        %v297 = vunpack.c.h.b16 %v221
        %v298 = vunpack.c.l.b16 %v222
        %v299 = vunpack.c.h.b16 %v222
        %v300 = vunpack.c.l.b16 %v223
        %v301 = vunpack.c.h.b16 %v223
        %v302 = vunpack.c.l.b16 %v224
        %v303 = vunpack.c.h.b16 %v224
        %v304 = vunpack.c.l.b16 %v225
        %v305 = vunpack.c.h.b16 %v225
        %v306 = vunpack.c.l.b16 %v226
        %v307 = vunpack.c.h.b16 %v226
        %v308 = vunpack.c.l.b16 %v227
        %v309 = vunpack.c.h.b16 %v227
        %v310 = vunpack.c.l.b16 %v228
        %v311 = vunpack.c.h.b16 %v228
        %v312 = vunpack.c.l.b16 %v229
        %v313 = vunpack.c.h.b16 %v229
        %v314 = vunpack.c.l.b16 %v230
        %v315 = vunpack.c.h.b16 %v230
        %v316 = vunpack.c.l.b16 %v231
        %v317 = vunpack.c.h.b16 %v231
        %v318 = vunpack.c.l.b16 %v232
        %v319 = vunpack.c.h.b16 %v232
        %v320 = vunpack.c.l.b16 %v233
        %v321 = vunpack.c.h.b16 %v233
        %v322 = vunpack.c.l.b16 %v234
        %v323 = vunpack.c.h.b16 %v234
        %v324 = vunpack.c.l.b16 %v235
        %v325 = vunpack.c.h.b16 %v235
        %v326 = vunpack.c.l.b16 %v236
        %v327 = vunpack.c.h.b16 %v236
        %v328 = vunpack.c.l.b16 %v237
        %v329 = vunpack.c.h.b16 %v237
        %v330 = vunpack.c.l.b16 %v238
        %v331 = vunpack.c.h.b16 %v238
        %v332 = vunpack.c.l.b16 %v239
        %v333 = vunpack.c.h.b16 %v239
        %v334 = vunpack.c.l.b16 %v240
        %v335 = vunpack.c.h.b16 %v240
        %v336 = vunpack.c.l.b16 %v241
        %v337 = vunpack.c.h.b16 %v241
        %v338 = vpack.c.b16 %v276, %v274
        %v339 = vpack.c.b16 %v277, %v275
        %v340 = vpack.c.b16 %v280, %v278
        %v341 = vpack.c.b16 %v281, %v279
        %v342 = vpack.c.b16 %v284, %v282
        %v343 = vpack.c.b16 %v285, %v283
        %v344 = vpack.c.b16 %v288, %v286
        %v345 = vpack.c.b16 %v289, %v287
        %v346 = vpack.c.b16 %v292, %v290
        %v347 = vpack.c.b16 %v293, %v291
        %v348 = vpack.c.b16 %v296, %v294
        %v349 = vpack.c.b16 %v297, %v295
        %v350 = vpack.c.b16 %v300, %v298
        %v351 = vpack.c.b16 %v301, %v299
        %v352 = vpack.c.b16 %v304, %v302
        %v353 = vpack.c.b16 %v305, %v303
        %v354 = vpack.c.b16 %v308, %v306
        %v355 = vpack.c.b16 %v309, %v307
        %v356 = vpack.c.b16 %v312, %v310
        %v357 = vpack.c.b16 %v313, %v311
        %v358 = vpack.c.b16 %v316, %v314
        %v359 = vpack.c.b16 %v317, %v315
        %v360 = vpack.c.b16 %v320, %v318
        %v361 = vpack.c.b16 %v321, %v319
        %v362 = vpack.c.b16 %v324, %v322
        %v363 = vpack.c.b16 %v325, %v323
        %v364 = vpack.c.b16 %v328, %v326
        %v365 = vpack.c.b16 %v329, %v327
        %v366 = vpack.c.b16 %v332, %v330
        %v367 = vpack.c.b16 %v333, %v331
        %v368 = vpack.c.b16 %v336, %v334
        %v369 = vpack.c.b16 %v337, %v335
        %402 = vmatprep.subr.bf16.mxu0 %v339
        %403 = vmatpush1.bf16.msra.mxu0 %v338
        %404 = vmatprep.subr.bf16.mxu0 %v341
        %405 = vmatpush1.bf16.msra.mxu0 %v340
        %406 = vmatprep.subr.bf16.mxu0 %v343
        %407 = vmatpush1.bf16.msra.mxu0 %v342
        %408 = vmatprep.subr.bf16.mxu0 %v345
        %409 = vmatpush1.bf16.msra.mxu0 %v344
        %410 = vmatprep.subr.bf16.mxu0 %v347
        %411 = vmatpush1.bf16.msra.mxu0 %v346
        %412 = vmatprep.subr.bf16.mxu0 %v349
        %413 = vmatpush1.bf16.msra.mxu0 %v348
        %414 = vmatprep.subr.bf16.mxu0 %v351
        %415 = vmatpush1.bf16.msra.mxu0 %v350
        %416 = vmatprep.subr.bf16.mxu0 %v353
        %417 = vmatpush1.bf16.msra.mxu0 %v352
        %418 = vmatprep.subr.bf16.mxu0 %v355
        %419 = vmatpush1.bf16.msra.mxu0 %v354
        %420 = vmatprep.subr.bf16.mxu0 %v357
        %421 = vmatpush1.bf16.msra.mxu0 %v356
        %422 = vmatprep.subr.bf16.mxu0 %v359
        %423 = vmatpush1.bf16.msra.mxu0 %v358
        %424 = vmatprep.subr.bf16.mxu0 %v361
        %425 = vmatpush1.bf16.msra.mxu0 %v360
        %426 = vmatprep.subr.bf16.mxu0 %v363
        %427 = vmatpush1.bf16.msra.mxu0 %v362
        %428 = vmatprep.subr.bf16.mxu0 %v365
        %429 = vmatpush1.bf16.msra.mxu0 %v364
        %430 = vmatprep.subr.bf16.mxu0 %v367
        %431 = vmatpush1.bf16.msra.mxu0 %v366
        %432 = vmatprep.subr.bf16.mxu0 %v369
        %433 = vmatpush1.bf16.msra.mxu0 %v368
        %434 = vmatprep.mubr.bf16.mxu0 %v207
        %435 = vmatmul.mubr.bf16.gmra.mrb[0].mxu0 %v206
        %v436 = vpop.f32.mrb[0].mxu0
        %v437 = vadd.f32 0.0, %v436
        %v438 = vpop.f32.mrb[0].mxu0
        %v439 = vadd.f32 0.0, %v438
        %v440 = vpop.f32.mrb[0].mxu0
        %v441 = vadd.f32 0.0, %v440
        %v442 = vpop.f32.mrb[0].mxu0
        %v443 = vadd.f32 0.0, %v442
        %444 = vmatprep.mubr.bf16.mxu0 %v209
        %445 = vmatmul.mubr.bf16.gmra.mrb[0].mxu0 %v208
        %v446 = vpop.f32.mrb[0].mxu0
        %v447 = vadd.f32 0.0, %v446
        %v448 = vpop.f32.mrb[0].mxu0
        %v449 = vadd.f32 0.0, %v448
        %v450 = vpop.f32.mrb[0].mxu0
        %v451 = vadd.f32 0.0, %v450
        %v452 = vpop.f32.mrb[0].mxu0
        %v453 = vadd.f32 0.0, %v452
        %454 = vdwg.mxu0
        %v455 = vlaneseq
        %v456 = vshrl.u32 %v455, 7
        %v457 = vsub.s32 8, %v456
        %v458 = vcvt.s32.f32 %v457
        %v459 = vmul.f32 %v437, %v458
        %v460 = vmul.f32 %v439, %v458
        %v461 = vmul.f32 %v441, %v458
        %v462 = vmul.f32 %v443, %v458
        %v463 = vmul.f32 %v447, %v458
        %v464 = vmul.f32 %v449, %v458
        %v465 = vmul.f32 %v451, %v458
        %v466 = vmul.f32 %v453, %v458
        %v467 = vrot.slane %v459, 4
        %v468 = vadd.f32 %v459, %v467
        %v469 = vrot.slane %v468, 2
        %v470 = vadd.f32 %v468, %v469
        %v471 = vrot.slane %v470, 1
        %v472 = vadd.f32 %v470, %v471
        %v473 = vrot.slane %v460, 4
        %v474 = vadd.f32 %v460, %v473
        %v475 = vrot.slane %v474, 2
        %v476 = vadd.f32 %v474, %v475
        %v477 = vrot.slane %v476, 1
        %v478 = vadd.f32 %v476, %v477
        %v479 = vrot.slane %v461, 4
        %v480 = vadd.f32 %v461, %v479
        %v481 = vrot.slane %v480, 2
        %v482 = vadd.f32 %v480, %v481
        %v483 = vrot.slane %v482, 1
        %v484 = vadd.f32 %v482, %v483
        %v485 = vrot.slane %v462, 4
        %v486 = vadd.f32 %v462, %v485
        %v487 = vrot.slane %v486, 2
        %v488 = vadd.f32 %v486, %v487
        %v489 = vrot.slane %v488, 1
        %v490 = vadd.f32 %v488, %v489
        %v491 = vrot.slane %v463, 4
        %v492 = vadd.f32 %v463, %v491
        %v493 = vrot.slane %v492, 2
        %v494 = vadd.f32 %v492, %v493
        %v495 = vrot.slane %v494, 1
        %v496 = vadd.f32 %v494, %v495
        %v497 = vrot.slane %v464, 4
        %v498 = vadd.f32 %v464, %v497
        %v499 = vrot.slane %v498, 2
        %v500 = vadd.f32 %v498, %v499
        %v501 = vrot.slane %v500, 1
        %v502 = vadd.f32 %v500, %v501
        %v503 = vrot.slane %v465, 4
        %v504 = vadd.f32 %v465, %v503
        %v505 = vrot.slane %v504, 2
        %v506 = vadd.f32 %v504, %v505
        %v507 = vrot.slane %v506, 1
        %v508 = vadd.f32 %v506, %v507
        %v509 = vrot.slane %v466, 4
        %v510 = vadd.f32 %v466, %v509
        %v511 = vrot.slane %v510, 2
        %v512 = vadd.f32 %v510, %v511
        %v513 = vrot.slane %v512, 1
        %v514 = vadd.f32 %v512, %v513
        %519 = vrot.lane.b32.xlu0 %v472, 64
        %v520 = vpop.permute.xlu0 %519
        %521 = vrot.lane.b32.xlu0 %v484, 64
        %v522 = vpop.permute.xlu0 %521
        %523 = vrot.lane.b32.xlu0 %v496, 64
        %v524 = vpop.permute.xlu0 %523
        %525 = vrot.lane.b32.xlu0 %v508, 64
        %v526 = vpop.permute.xlu0 %525
        %vm531 = vcmp.gt.f32.partialorder %v472, %v520
        %vm532 = vcmp.gt.f32.partialorder %v484, %v522
        %vm533 = vcmp.gt.f32.partialorder %v496, %v524
        %vm534 = vcmp.gt.f32.partialorder %v508, %v526
        %v535 = vsel %vm531, %v472, %v520
        %v536 = vsel %vm532, %v484, %v522
        %v537 = vsel %vm533, %v496, %v524
        %v538 = vsel %vm534, %v508, %v526
        %v539 = vsel %vm531, 1, 0
        %v540 = vsel %vm532, 1, 0
        %v541 = vsel %vm533, 1, 0
        %v542 = vsel %vm534, 1, 0
        %v543 = vlaneseq
        %v544 = vshrl.u32 %v543, 7
        %v545 = vsub.s32 0, %v544
        %v546 = vrot.slane %v539, %v545
        %v547 = vlaneseq
        %v548 = vshrl.u32 %v547, 7
        %v549 = vsub.s32 0, %v548
        %v550 = vrot.slane %v540, %v549
        %v551 = vlaneseq
        %v552 = vshrl.u32 %v551, 7
        %v553 = vsub.s32 0, %v552
        %v554 = vrot.slane %v541, %v553
        %v555 = vlaneseq
        %v556 = vshrl.u32 %v555, 7
        %v557 = vsub.s32 0, %v556
        %v558 = vrot.slane %v542, %v557
        %vm559 = vcmp.eq.s32.totalorder %v546, 1
        %vm560 = vcmp.eq.s32.totalorder %v550, 1
        %vm561 = vcmp.eq.s32.totalorder %v554, 1
        %vm562 = vcmp.eq.s32.totalorder %v558, 1
        %567 = vrot.lane.b32.xlu0 %v437, 64
        %v568 = vpop.permute.xlu0 %567
        %569 = vrot.lane.b32.xlu0 %v441, 64
        %v570 = vpop.permute.xlu0 %569
        %571 = vrot.lane.b32.xlu0 %v447, 64
        %v572 = vpop.permute.xlu0 %571
        %573 = vrot.lane.b32.xlu0 %v451, 64
        %v574 = vpop.permute.xlu0 %573
        %v579 = vsel %vm559, %v437, %v568
        %v580 = vsel %vm560, %v441, %v570
        %v581 = vsel %vm561, %v447, %v572
        %v582 = vsel %vm562, %v451, %v574
        %587 = vrot.lane.b32.xlu0 %v535, 64
        %v588 = vpop.permute.xlu0 %587
        %589 = vrot.lane.b32.xlu0 %v536, 64
        %v590 = vpop.permute.xlu0 %589
        %591 = vrot.lane.b32.xlu0 %v537, 64
        %v592 = vpop.permute.xlu0 %591
        %593 = vrot.lane.b32.xlu0 %v538, 64
        %v594 = vpop.permute.xlu0 %593
        %vm599 = vcmp.gt.f32.partialorder %v478, %v588
        %vm600 = vcmp.gt.f32.partialorder %v490, %v590
        %vm601 = vcmp.gt.f32.partialorder %v502, %v592
        %vm602 = vcmp.gt.f32.partialorder %v514, %v594
        %v603 = vsel %vm599, %v478, %v588
        %v604 = vsel %vm600, %v490, %v590
        %v605 = vsel %vm601, %v502, %v592
        %v606 = vsel %vm602, %v514, %v594
        %v607 = vsel %vm599, 1, 0
        %v608 = vsel %vm600, 1, 0
        %v609 = vsel %vm601, 1, 0
        %v610 = vsel %vm602, 1, 0
        %v611 = vlaneseq
        %v612 = vshrl.u32 %v611, 7
        %v613 = vsub.s32 0, %v612
        %v614 = vrot.slane %v607, %v613
        %v615 = vlaneseq
        %v616 = vshrl.u32 %v615, 7
        %v617 = vsub.s32 0, %v616
        %v618 = vrot.slane %v608, %v617
        %v619 = vlaneseq
        %v620 = vshrl.u32 %v619, 7
        %v621 = vsub.s32 0, %v620
        %v622 = vrot.slane %v609, %v621
        %v623 = vlaneseq
        %v624 = vshrl.u32 %v623, 7
        %v625 = vsub.s32 0, %v624
        %v626 = vrot.slane %v610, %v625
        %vm627 = vcmp.eq.s32.totalorder %v614, 1
        %vm628 = vcmp.eq.s32.totalorder %v618, 1
        %vm629 = vcmp.eq.s32.totalorder %v622, 1
        %vm630 = vcmp.eq.s32.totalorder %v626, 1
        %635 = vrot.lane.b32.xlu0 %v579, 64
        %v636 = vpop.permute.xlu0 %635
        %637 = vrot.lane.b32.xlu0 %v580, 64
        %v638 = vpop.permute.xlu0 %637
        %639 = vrot.lane.b32.xlu0 %v581, 64
        %v640 = vpop.permute.xlu0 %639
        %641 = vrot.lane.b32.xlu0 %v582, 64
        %v642 = vpop.permute.xlu0 %641
        %v647 = vsel %vm627, %v439, %v636
        %v648 = vsel %vm628, %v443, %v638
        %v649 = vsel %vm629, %v449, %v640
        %v650 = vsel %vm630, %v453, %v642
        %655 = vrot.lane.b32.xlu0 %v603, 64
        %v656 = vpop.permute.xlu0 %655
        %657 = vrot.lane.b32.xlu0 %v604, 64
        %v658 = vpop.permute.xlu0 %657
        %659 = vrot.lane.b32.xlu0 %v605, 64
        %v660 = vpop.permute.xlu0 %659
        %661 = vrot.lane.b32.xlu0 %v606, 64
        %v662 = vpop.permute.xlu0 %661
        %vm667 = vcmp.gt.f32.partialorder %v478, %v656
        %vm668 = vcmp.gt.f32.partialorder %v490, %v658
        %vm669 = vcmp.gt.f32.partialorder %v502, %v660
        %vm670 = vcmp.gt.f32.partialorder %v514, %v662
        %v671 = vsel %vm667, 1, 0
        %v672 = vsel %vm668, 1, 0
        %v673 = vsel %vm669, 1, 0
        %v674 = vsel %vm670, 1, 0
        %v675 = vlaneseq
        %v676 = vshrl.u32 %v675, 7
        %v677 = vsub.s32 0, %v676
        %v678 = vrot.slane %v671, %v677
        %v679 = vlaneseq
        %v680 = vshrl.u32 %v679, 7
        %v681 = vsub.s32 0, %v680
        %v682 = vrot.slane %v672, %v681
        %v683 = vlaneseq
        %v684 = vshrl.u32 %v683, 7
        %v685 = vsub.s32 0, %v684
        %v686 = vrot.slane %v673, %v685
        %v687 = vlaneseq
        %v688 = vshrl.u32 %v687, 7
        %v689 = vsub.s32 0, %v688
        %v690 = vrot.slane %v674, %v689
        %vm691 = vcmp.eq.s32.totalorder %v678, 1
        %vm692 = vcmp.eq.s32.totalorder %v682, 1
        %vm693 = vcmp.eq.s32.totalorder %v686, 1
        %vm694 = vcmp.eq.s32.totalorder %v690, 1
        %699 = vrot.lane.b32.xlu0 %v647, 64
        %v700 = vpop.permute.xlu0 %699
        %701 = vrot.lane.b32.xlu0 %v648, 64
        %v702 = vpop.permute.xlu0 %701
        %703 = vrot.lane.b32.xlu0 %v649, 64
        %v704 = vpop.permute.xlu0 %703
        %705 = vrot.lane.b32.xlu0 %v650, 64
        %v706 = vpop.permute.xlu0 %705
        %v711 = vsel %vm691, %v439, %v700
        %v712 = vsel %vm692, %v443, %v702
        %v713 = vsel %vm693, %v449, %v704
        %v714 = vsel %vm694, %v453, %v706
        %716 = vrot.lane.b32.xlu0 %v711, 64
        %v717 = vpop.permute.xlu0 %716
        %720 = vrot.lane.b32.xlu0 %v713, 64
        %v721 = vpop.permute.xlu0 %720
        %vm723 = vcmask 523264
        %v724 = vsel %vm723, %v717, %v712
        %v725 = vsel %vm723, %v721, %v714
        %726 = vst [vmem:[%s195] sm:$0xff] %v724
        %727 = vst [vmem:[%s195 + $0x8] sm:$0xff] %v725
        %s728 = sand.u32 %s91, 1
        %s729 = scalar_lea.sflag [#allocation4], %s728
        %s730 = sand.u32 %s91, 1
        %s731 = smul.addr %s730, 16
        %s732 = scalar_lea.vmem [#allocation7], %s731
        // Predicated region
        $region37: #{tpu_custom_call.1} parent=27 // pred_check
          %p733 = pneg %p101
        $region38: #{tpu_custom_call.1} parent=27 // pred_check_branch
          %735 = sbr.rel (%p733) target = $region40
        $region39: #{tpu_custom_call.1} parent=27 // pred_region
          %s736 = smul.u32 2, %s25
          %s738 = ssub.s32 256, 256
          %739 = vsyncadd %s729, %s738
          %s740 = smul.addr %s24, 2
          %s741 = sadd.s32 %s736, %s740
          %s742 = smul.addr %s741, 128
          %s743 = scalar_lea.hbm %s2, %s742
          %s745 = sshll.u32 %s732, 4
          %s746 = int_to_ptr.vmem [resolvable:$true] %s745
          %748 = dma.vmem_to_hbm [thread:$0]  %s746, 256, %s743, %s729
        $region40: #{tpu_custom_call.1} parent=27 // pred_fallthru
          _
      $region28: #{tpu_custom_call.1} parent=5 // pred_fallthru
        _
      %p749 = scmp.le.s32.totalorder 2, %s15
      // Predicated region
      $region41: #{tpu_custom_call.1} parent=5 // pred_check
        %p750 = pneg %p749
      $region42: #{tpu_custom_call.1} parent=5 // pred_check_branch
        %752 = sbr.rel (%p750) target = $region44
      $region43: #{tpu_custom_call.1} parent=5 // pred_region
        %s753 = ssub.s32 %s15, 2
        // Predicated region
        $region45: #{tpu_custom_call.1} parent=43 // pred_check
          %p754 = pneg %p107
        $region46: #{tpu_custom_call.1} parent=43 // pred_check_branch
          %756 = sbr.rel (%p754) target = $region48
        $region47: #{tpu_custom_call.1} parent=43 // pred_region
          %s757 = sand.u32 %s92, 1
          %s758 = scalar_lea.sflag [#allocation4], %s757
          %s759 = sand.u32 %s92, 1
          %s760 = smul.addr %s759, 16
          %s761 = scalar_lea.vmem [#allocation7], %s760
          %762 = dma.done %s758, 256
        $region48: #{tpu_custom_call.1} parent=43 // pred_fallthru
          _
      $region44: #{tpu_custom_call.1} parent=5 // pred_fallthru
        _
    $region6: #{tpu_custom_call.1} parent=1 // loop_footer
      %s19 = sadd.s32 1, %s15
    $region7: #{tpu_custom_call.1} parent=1 // loop_footer_branch
      %14 = sbr.rel target = $region3
    $region8: #{tpu_custom_call.1} parent=1 // loop_exit
      _
    %763 = vsyncpa [#allocation3], 1
    %s764 = scalar_lea.sflag [#allocation3], 1
    %765 = vsyncpa %s764, 1
    %766 = vsyncpa [#allocation6], 1
    %767 = vsyncpa [#allocation4], 1
    %s768 = scalar_lea.sflag [#allocation4], 1
    %769 = vsyncpa %s768, 1

</llo_original>
